<compile_context>
chip_gen: v7x
topology: tpu7x:2x2x1
jax: 0.10.0
libtpu: 0.0.40
codegen_flags: <defaults>
</compile_context>

<pallas_src>
import functools

import jax
import jax.numpy as jnp
from jax.experimental import pallas as pl
from jax.experimental.pallas import tpu as pltpu

LANE = 128
# Conservative default tile that fits comfortably in scoped VMEM on v5e/v6e/v7x
# (per-step ~ <1 MiB at these feature widths); bump to 1024-2048 on v6e if
# profiling shows per-step overhead dominating.
DEFAULT_TILE_M = 512


def _round_up(x, m):
    return (x + m - 1) // m * m


def _hetemb_kernel(x_ref, w_ref, b_ref, pt_out_ref, pc_out_ref, *, ct_dim, ct_pad):
    # x_ref:  [tm, time_num + cat_num]        (concatenated inputs)
    # w_ref:  [time_num + cat_num, 2*ct_pad]  (block-diagonal, resident)
    # b_ref:  [1, 2*ct_pad]                   (concatenated bias, resident)
    # One MXU matmul for both heads, f32 accumulation.
    acc = jnp.dot(x_ref[...], w_ref[...], preferred_element_type=jnp.float32)
    acc = acc + b_ref[...]
    # Write each head directly at its final (N, ct_dim) shape — the two halves
    # start at lane-tile-aligned columns 0 and ct_pad, so only the stores to
    # the sub-128-wide outputs are masked (noise at these sizes).
    pt_out_ref[...] = acc[:, :ct_dim].astype(pt_out_ref.dtype)
    pc_out_ref[...] = acc[:, ct_pad:ct_pad + ct_dim].astype(pc_out_ref.dtype)


@functools.partial(jax.jit, static_argnames=("ct_dim", "tile_m"))
def hetemb_forward(poi_time, poi_cat, w_bd, bias_bd, *, ct_dim, tile_m=DEFAULT_TILE_M):
    """Fused HetEmb forward: both heads in one Pallas launch, one matmul."""
    n = poi_time.shape[0]
    k_total = w_bd.shape[0]          # time_num + cat_num
    out_pad = w_bd.shape[1]          # 2 * ct_pad
    ct_pad = out_pad // 2

    # Per-POI rows: both inputs share the row axis (see TODO in __call__).
    x = jnp.concatenate([poi_time, poi_cat], axis=1)  # (n, k_total)

    tm = min(tile_m, _round_up(n, 8))
    grid = (pl.cdiv(n, tm),)

    kernel = functools.partial(_hetemb_kernel, ct_dim=ct_dim, ct_pad=ct_pad)

    pt_emb, pc_emb = pl.pallas_call(
        kernel,
        out_shape=(
            jax.ShapeDtypeStruct((n, ct_dim), poi_time.dtype),
            jax.ShapeDtypeStruct((n, ct_dim), poi_cat.dtype),
        ),
        grid_spec=pltpu.PrefetchScalarGridSpec(
            num_scalar_prefetch=0,
            grid=grid,
            in_specs=[
                pl.BlockSpec((tm, k_total), lambda i: (i, 0)),       # activations, row-tiled
                pl.BlockSpec((k_total, out_pad), lambda i: (0, 0)),  # weights, resident
                pl.BlockSpec((1, out_pad), lambda i: (0, 0)),        # bias, resident
            ],
            out_specs=[
                pl.BlockSpec((tm, ct_dim), lambda i: (i, 0)),
                pl.BlockSpec((tm, ct_dim), lambda i: (i, 0)),
            ],
        ),
        compiler_params=pltpu.CompilerParams(
            dimension_semantics=("parallel",),  # no reduction across the row grid
        ),
        cost_estimate=pl.CostEstimate(
            flops=2 * n * k_total * out_pad,
            transcendentals=0,
            bytes_accessed=4 * (n * k_total + k_total * out_pad + out_pad + 2 * n * ct_dim),
        ),
    )(x, w_bd, bias_bd)

    return pt_emb, pc_emb


class HetEmbPallas:
    """JAX/Pallas port of the PyTorch HetEmb module (single fused matmul)."""

    def __init__(self, ct_dim, time_num, cat_num, key):
        self.ct_dim = ct_dim
        self.time_num = time_num
        self.cat_num = cat_num
        k1, k2, k3, k4 = jax.random.split(key, 4)
        # nn.Linear default init: uniform in +-1/sqrt(fan_in).
        lim1 = 1.0 / (time_num ** 0.5)
        lim2 = 1.0 / (cat_num ** 0.5)
        # Weights stored pre-transposed as [in_dim, ct_dim]: this is both the
        # MXU-friendly layout and exactly the time_emb / cat_emb return value.
        self.w1_t = jax.random.uniform(k1, (time_num, ct_dim), jnp.float32, -lim1, lim1)
        self.b1 = jax.random.uniform(k2, (ct_dim,), jnp.float32, -lim1, lim1)
        self.w2_t = jax.random.uniform(k3, (cat_num, ct_dim), jnp.float32, -lim2, lim2)
        self.b2 = jax.random.uniform(k4, (ct_dim,), jnp.float32, -lim2, lim2)

        # One-time layout glue hoisted out of the call path: block-diagonal
        # packed weight + concatenated bias. Each head's output half is padded
        # to a 128-lane boundary so the fused output tile is 2*ct_pad wide
        # (256 for ct_dim=32 -> matches v6e/v7x 2x256x256 MXU, two clean 128
        # tiles on v5e) and the second head's columns start tile-aligned.
        ct_pad = _round_up(ct_dim, LANE)
        self.ct_pad = ct_pad
        k_total = time_num + cat_num
        w_bd = jnp.zeros((k_total, 2 * ct_pad), jnp.float32)
        w_bd = w_bd.at[:time_num, :ct_dim].set(self.w1_t)
        w_bd = w_bd.at[time_num:, ct_pad:ct_pad + ct_dim].set(self.w2_t)
        bias_bd = jnp.zeros((1, 2 * ct_pad), jnp.float32)
        bias_bd = bias_bd.at[0, :ct_dim].set(self.b1)
        bias_bd = bias_bd.at[0, ct_pad:ct_pad + ct_dim].set(self.b2)
        self.w_bd = w_bd
        self.bias_bd = bias_bd
        # TODO(synk): on v5e, casting w_bd / activations to bfloat16 (keeping
        # preferred_element_type=f32) halves DMA bytes if this ever becomes
        # bandwidth-relevant.

    def __call__(self, poi_time, poi_cat):
        # TODO(synk): the fused block-diagonal path assumes poi_time/poi_cat
        # share the per-POI row axis (as in the reference usage); unequal row
        # counts would need the unfused two-head variant.
        assert poi_time.shape[0] == poi_cat.shape[0]
        pt_emb, pc_emb = hetemb_forward(
            poi_time, poi_cat, self.w_bd, self.bias_bd, ct_dim=self.ct_dim,
        )
        # time_emb = fc1.weight.permute(1,0), cat_emb = fc2.weight.permute(1,0):
        # already stored in that layout, returned with zero per-call work.
        return pt_emb, pc_emb, self.w1_t, self.w2_t


if __name__ == "__main__":
    key = jax.random.PRNGKey(0)
    k_mod, k_t, k_c = jax.random.split(key, 3)

    ct_dim, time_num, cat_num = 32, 24, 16
    n_poi = 8

    model = HetEmbPallas(ct_dim, time_num, cat_num, k_mod)

    poi_time = jax.random.normal(k_t, (n_poi, time_num), jnp.float32)
    poi_cat = jax.random.normal(k_c, (n_poi, cat_num), jnp.float32)

    pt_emb, pc_emb, time_emb, cat_emb = model(poi_time, poi_cat)
    jax.block_until_ready((pt_emb, pc_emb, time_emb, cat_emb))

    # Sanity-check against plain-JAX reference (nn.Linear semantics).
    ref_pt = poi_time @ model.w1_t + model.b1
    ref_pc = poi_cat @ model.w2_t + model.b2
    assert pt_emb.shape == (n_poi, ct_dim)
    assert pc_emb.shape == (n_poi, ct_dim)
    assert time_emb.shape == (time_num, ct_dim)
    assert cat_emb.shape == (cat_num, ct_dim)
    assert jnp.allclose(pt_emb, ref_pt, atol=1e-5)
    assert jnp.allclose(pc_emb, ref_pc, atol=1e-5)

    print("KERNEL_OK")
</pallas_src>

<mosaic_0001>
module attributes {stable_mosaic.version = 11 : i64} {
  func.func @_hetemb_kernel(%arg0: i32, %arg1: memref<8x40xf32, #tpu.memory_space<vmem>>, %arg2: memref<40x256xf32, #tpu.memory_space<vmem>>, %arg3: memref<1x256xf32, #tpu.memory_space<vmem>>, %arg4: memref<8x32xf32, #tpu.memory_space<vmem>>, %arg5: memref<8x32xf32, #tpu.memory_space<vmem>>) attributes {dimension_semantics = [#tpu.dimension_semantics<parallel>], iteration_bounds = array<i64: 1>, scalar_prefetch = 0 : i64, scratch_operands = 0 : i64, tpu.core_type = #tpu.core_type<tc>, window_params = [{transform_indices = @transform_0, window_bounds = array<i64: 8, 40>}, {pipeline_mode = #tpu.pipeline_mode<synchronous>, transform_indices = @transform_1, window_bounds = array<i64: 40, 256>}, {pipeline_mode = #tpu.pipeline_mode<synchronous>, transform_indices = @transform_2, window_bounds = array<i64: 1, 256>}, {transform_indices = @transform_3, window_bounds = array<i64: 8, 32>}, {transform_indices = @transform_4, window_bounds = array<i64: 8, 32>}]} {
    %c0 = arith.constant 0 : index
    %c0_0 = arith.constant 0 : index
    %0 = vector.load %arg1[%c0, %c0_0] : memref<8x40xf32, #tpu.memory_space<vmem>>, vector<8x40xf32>
    %c0_1 = arith.constant 0 : index
    %c0_2 = arith.constant 0 : index
    %1 = vector.load %arg2[%c0_1, %c0_2] : memref<40x256xf32, #tpu.memory_space<vmem>>, vector<40x256xf32>
    %cst = arith.constant dense<0.000000e+00> : vector<8x256xf32>
    %2 = tpu.matmul %0, %1, %cst {dimension_numbers = #tpu.dot_dimension_numbers<[1], [0], [0], [1], [0, 0, 1, 1], [], []>} : vector<8x40xf32>, vector<40x256xf32>, vector<8x256xf32> -> vector<8x256xf32>
    %c0_3 = arith.constant 0 : index
    %c0_4 = arith.constant 0 : index
    %3 = vector.load %arg3[%c0_3, %c0_4] : memref<1x256xf32, #tpu.memory_space<vmem>>, vector<1x256xf32>
    %4 = vector.broadcast %3 : vector<1x256xf32> to vector<8x256xf32>
    %5 = arith.addf %2, %4 : vector<8x256xf32>
    %6 = vector.extract_strided_slice %5 {offsets = [0, 0], sizes = [8, 32], strides = [1, 1]} : vector<8x256xf32> to vector<8x32xf32>
    %c0_5 = arith.constant 0 : index
    %c0_6 = arith.constant 0 : index
    %7 = vector.load %arg4[%c0_5, %c0_6] : memref<8x32xf32, #tpu.memory_space<vmem>>, vector<8x32xf32>
    tpu.vector_store %arg4[%c0_5, %c0_6], %6 {strides = array<i32>} : memref<8x32xf32, #tpu.memory_space<vmem>>, vector<8x32xf32>,
    %8 = vector.extract_strided_slice %5 {offsets = [0, 128], sizes = [8, 32], strides = [1, 1]} : vector<8x256xf32> to vector<8x32xf32>
    %c0_7 = arith.constant 0 : index
    %c0_8 = arith.constant 0 : index
    %9 = vector.load %arg5[%c0_7, %c0_8] : memref<8x32xf32, #tpu.memory_space<vmem>>, vector<8x32xf32>
    tpu.vector_store %arg5[%c0_7, %c0_8], %8 {strides = array<i32>} : memref<8x32xf32, #tpu.memory_space<vmem>>, vector<8x32xf32>,
    return
  }
  func.func @transform_0(%arg0: i32) -> (i32, i32) {
    %c0_i32 = arith.constant 0 : i32
    %c0_i32_0 = arith.constant 0 : i32
    return %arg0, %c0_i32 : i32, i32
  }
  func.func @transform_1(%arg0: i32) -> (i32, i32) {
    %c0_i32 = arith.constant 0 : i32
    %c0_i32_0 = arith.constant 0 : i32
    %c0_i32_1 = arith.constant 0 : i32
    return %c0_i32, %c0_i32_0 : i32, i32
  }
  func.func @transform_2(%arg0: i32) -> (i32, i32) {
    %c0_i32 = arith.constant 0 : i32
    %c0_i32_0 = arith.constant 0 : i32
    %c0_i32_1 = arith.constant 0 : i32
    return %c0_i32, %c0_i32_0 : i32, i32
  }
  func.func @transform_3(%arg0: i32) -> (i32, i32) {
    %c0_i32 = arith.constant 0 : i32
    %c0_i32_0 = arith.constant 0 : i32
    return %arg0, %c0_i32 : i32, i32
  }
  func.func @transform_4(%arg0: i32) -> (i32, i32) {
    %c0_i32 = arith.constant 0 : i32
    %c0_i32_0 = arith.constant 0 : i32
    return %arg0, %c0_i32 : i32, i32
  }
}

</mosaic_0001>

<llo_original>
// kernel: hetemb_forward.1
$region0: #{hetemb_forward.1}
  #allocation0 [shape = 'u32[]', space=smem, size = 0x4, offset = 0x4, fixed_abs, tag = 'smem constant byte address 0x4 - core index']
  #allocation1 [shape = 'u32[144,128]{1,0:T(1,128)}', space=vmem, size = 0x12000, scoped, tag = 'internal scratch']
  %s0 = inlined_call_operand.vmem [shape: f32[8,40], index: 0, kind: input, shape index: {}]
  %s1 = inlined_call_operand.hbm [shape: f32[40,256], index: 1, kind: input, shape index: {}]
  %s2 = inlined_call_operand.vmem [shape: f32[1,256], index: 2, kind: input, shape index: {}]
  %s3 = inlined_call_operand.hbm [shape: f32[8,32], index: 3, kind: output, shape index: {0}]
  %s4 = inlined_call_operand.hbm [shape: f32[8,32], index: 4, kind: output, shape index: {1}]
  %5 = xla_tuple %s3, %s4
  %s6 = sld [smem:[#allocation0]]
  $region34: #{hetemb_forward.1} parent=0
    _
  %s8 = ssub.s32 1, %s6
  %s9 = scalar_select 0, %s8, %s6
  $region1: #{hetemb_forward.1} parent=0
    #allocation2 [shape = 'u8[40960]{0}', space=vmem, size = 0xa000, scoped, tag = 'input window, operand 1, single buffered']
    #allocation3 [shape = 's32[1]{0}', space=sflag, size = 0x4, scoped, tag = 'scoped memory for hetemb_forward.1']
    #allocation4 [shape = 's32[1]{0}', space=sflag, size = 0x4, scoped, tag = 'scoped memory for hetemb_forward.1']
    #allocation5 [shape = 'u8[4096]{0}', space=vmem, size = 0x1000, scoped, tag = 'output window, operand 0, single buffered']
    #allocation6 [shape = 'u8[4096]{0}', space=vmem, size = 0x1000, scoped, tag = 'output window, operand 1, single buffered']
    #allocation7 [shape = 's32[1]{0}', space=sflag, size = 0x4, scoped, tag = 'scoped memory for hetemb_forward.1']
    %10 = vsyncpa [#allocation3], 0
    %11 = vsyncpa [#allocation4], 0
    %12 = vsyncpa [#allocation7], 0
    // Predicated region
    $region2: #{hetemb_forward.1} parent=1 // pred_check
      _
    $region3: #{hetemb_forward.1} parent=1 // pred_check_branch
      %14 = sbr.rel (0) target = $region5
    $region4: #{hetemb_forward.1} parent=1 // pred_region
      _
    $region5: #{hetemb_forward.1} parent=1 // pred_fallthru
      _
    // Predicated region
    $region6: #{hetemb_forward.1} parent=1 // pred_check
      _
    $region7: #{hetemb_forward.1} parent=1 // pred_check_branch
      %16 = sbr.rel (0) target = $region9
    $region8: #{hetemb_forward.1} parent=1 // pred_region
      %s18 = ssub.s32 1280, 1280
      %19 = vsyncadd [#allocation3], %s18
      %s20 = sshll.u32 [#allocation2], 4
      %s21 = int_to_ptr.vmem [resolvable:$true] %s20
      %26 = dma.hbm_to_vmem [thread:$0]  %s1, 1280, %s21, [#allocation3], 256, 256, 16
    $region9: #{hetemb_forward.1} parent=1 // pred_fallthru
      _
    // Predicated region
    $region10: #{hetemb_forward.1} parent=1 // pred_check
      _
    $region11: #{hetemb_forward.1} parent=1 // pred_check_branch
      %28 = sbr.rel (0) target = $region13
    $region12: #{hetemb_forward.1} parent=1 // pred_region
      _
    $region13: #{hetemb_forward.1} parent=1 // pred_fallthru
      _
    // Predicated region
    $region14: #{hetemb_forward.1} parent=1 // pred_check
      _
    $region15: #{hetemb_forward.1} parent=1 // pred_check_branch
      %30 = sbr.rel (0) target = $region17
    $region16: #{hetemb_forward.1} parent=1 // pred_region
      %31 = dma.done [#allocation3], 1280
    $region17: #{hetemb_forward.1} parent=1 // pred_fallthru
      _
    %v32 = vld [vmem:[%s0] sm:$0xff]
    %v33 = vld [vmem:[#allocation2] sm:$0xff]
    %v34 = vld [vmem:[#allocation2 + $0x8] sm:$0xff]
    %v35 = vld [vmem:[#allocation2 + $0x10] sm:$0xff]
    %v36 = vld [vmem:[#allocation2 + $0x18] sm:$0xff]
    %v37 = vld [vmem:[#allocation2 + $0x20] sm:$0xff]
    %v38 = vld [vmem:[#allocation2 + $0x28] sm:$0xff]
    %v39 = vld [vmem:[#allocation2 + $0x30] sm:$0xff]
    %v40 = vld [vmem:[#allocation2 + $0x38] sm:$0xff]
    %v41 = vld [vmem:[#allocation2 + $0x40] sm:$0xff]
    %v42 = vld [vmem:[#allocation2 + $0x48] sm:$0xff]
    %v43 = vld [vmem:[%s2] sm:$0x3]
    %v45 = vlaneseq
    %v46 = vshrl.u32 %v45, 7
    %v47 = vsub.s32 0, %v46
    %v48 = vrot.slane %v43, %v47
    %v49 = vlaneseq
    %v50 = vshrl.u32 %v49, 7
    %v51 = vsub.s32 1, %v50
    %v52 = vrot.slane %v43, %v51
    %vm55 = vcmask 326656
    %v57 = vsel %vm55, %v32, 0
    %59 = vmatprep.subr.mxu0 %v34
    %60 = vmatpush1.msra.mxu0 %v33
    %61 = vmatprep.subr.mxu0 %v36
    %62 = vmatpush1.msra.mxu0 %v35
    %63 = vmatprep.subr.mxu0 %v38
    %64 = vmatpush1.msra.mxu0 %v37
    %65 = vmatprep.subr.mxu0 %v40
    %66 = vmatpush1.msra.mxu0 %v39
    %67 = vmatprep.subr.mxu0 %v42
    %68 = vmatpush1.msra.mxu0 %v41
    %69 = vmatprep.subr.mxu0 0.0
    %70 = vmatpush1.msra.mxu0 0.0
    %71 = vmatprep.subr.mxu0 0.0
    %72 = vmatpush1.msra.mxu0 0.0
    %73 = vmatprep.subr.mxu0 0.0
    %74 = vmatpush1.msra.mxu0 0.0
    %75 = vmatprep.subr.mxu0 0.0
    %76 = vmatpush1.msra.mxu0 0.0
    %77 = vmatprep.subr.mxu0 0.0
    %78 = vmatpush1.msra.mxu0 0.0
    %79 = vmatprep.subr.mxu0 0.0
    %80 = vmatpush1.msra.mxu0 0.0
    %81 = vmatprep.subr.mxu0 0.0
    %82 = vmatpush1.msra.mxu0 0.0
    %83 = vmatprep.subr.mxu0 0.0
    %84 = vmatpush1.msra.mxu0 0.0
    %85 = vmatprep.subr.mxu0 0.0
    %86 = vmatpush1.msra.mxu0 0.0
    %87 = vmatprep.subr.mxu0 0.0
    %88 = vmatpush1.msra.mxu0 0.0
    %89 = vmatprep.subr.mxu0 0.0
    %90 = vmatpush1.msra.mxu0 0.0
    %91 = vmatprep.subr.mxu0 0.0
    %92 = vmatpush1.msra.mxu0 0.0
    %93 = vmatprep.subr.mxu0 0.0
    %94 = vmatpush1.msra.mxu0 0.0
    %95 = vmatprep.subr.mxu0 0.0
    %96 = vmatpush1.msra.mxu0 0.0
    %97 = vmatprep.subr.mxu0 0.0
    %98 = vmatpush1.msra.mxu0 0.0
    %99 = vmatprep.subr.mxu0 0.0
    %100 = vmatpush1.msra.mxu0 0.0
    %101 = vmatprep.subr.mxu0 0.0
    %102 = vmatpush1.msra.mxu0 0.0
    %103 = vmatprep.subr.mxu0 0.0
    %104 = vmatpush1.msra.mxu0 0.0
    %105 = vmatprep.subr.mxu0 0.0
    %106 = vmatpush1.msra.mxu0 0.0
    %107 = vmatprep.subr.mxu0 0.0
    %108 = vmatpush1.msra.mxu0 0.0
    %109 = vmatprep.subr.mxu0 0.0
    %110 = vmatpush1.msra.mxu0 0.0
    %111 = vmatprep.subr.mxu0 0.0
    %112 = vmatpush1.msra.mxu0 0.0
    %113 = vmatprep.subr.mxu0 0.0
    %114 = vmatpush1.msra.mxu0 0.0
    %115 = vmatprep.subr.mxu0 0.0
    %116 = vmatpush1.msra.mxu0 0.0
    %117 = vmatprep.subr.mxu0 0.0
    %118 = vmatpush1.msra.mxu0 0.0
    %119 = vmatprep.subr.mxu0 0.0
    %120 = vmatpush1.msra.mxu0 0.0
    %121 = vmatprep.subr.mxu0 0.0
    %122 = vmatpush1.msra.mxu0 0.0
    %123 = vmatprep.mubr.f32.mxu0 0.0
    %124 = vmatmul.mubr.f32.gmra.mrb[0].mxu0 %v57
    %v125 = vpop.f32.mrb[0].mxu0
    %v126 = vadd.f32 %v48, %v125
    %v127 = vpop.f32.mrb[0].mxu0
    %v128 = vadd.f32 %v52, %v127
    %129 = vdwg.mxu0
    %vm130 = vcmask 261120
    %131 = vst.msk [vmem:[#allocation5] sm:$0xff] %vm130, %v126
    %132 = vst.msk [vmem:[#allocation6] sm:$0xff] %vm130, %v128
    // Predicated region
    $region18: #{hetemb_forward.1} parent=1 // pred_check
      _
    $region19: #{hetemb_forward.1} parent=1 // pred_check_branch
      %134 = sbr.rel (0) target = $region21
    $region20: #{hetemb_forward.1} parent=1 // pred_region
      %s136 = ssub.s32 128, 128
      %137 = vsyncadd [#allocation4], %s136
      %s139 = sshll.u32 [#allocation5], 4
      %s140 = int_to_ptr.vmem [resolvable:$true] %s139
      %142 = dma.vmem_to_hbm [thread:$0]  %s140, 128, %s3, [#allocation4]
    $region21: #{hetemb_forward.1} parent=1 // pred_fallthru
      _
    // Predicated region
    $region22: #{hetemb_forward.1} parent=1 // pred_check
      _
    $region23: #{hetemb_forward.1} parent=1 // pred_check_branch
      %144 = sbr.rel (0) target = $region25
    $region24: #{hetemb_forward.1} parent=1 // pred_region
      %s146 = ssub.s32 128, 128
      %147 = vsyncadd [#allocation7], %s146
      %s149 = sshll.u32 [#allocation6], 4
      %s150 = int_to_ptr.vmem [resolvable:$true] %s149
      %152 = dma.vmem_to_hbm [thread:$0]  %s150, 128, %s4, [#allocation7]
    $region25: #{hetemb_forward.1} parent=1 // pred_fallthru
      _
    // Predicated region
    $region26: #{hetemb_forward.1} parent=1 // pred_check
      _
    $region27: #{hetemb_forward.1} parent=1 // pred_check_branch
      %154 = sbr.rel (0) target = $region29
    $region28: #{hetemb_forward.1} parent=1 // pred_region
      %155 = dma.done [#allocation4], 128
    $region29: #{hetemb_forward.1} parent=1 // pred_fallthru
      _
    // Predicated region
    $region30: #{hetemb_forward.1} parent=1 // pred_check
      _
    $region31: #{hetemb_forward.1} parent=1 // pred_check_branch
      %157 = sbr.rel (0) target = $region33
    $region32: #{hetemb_forward.1} parent=1 // pred_region
      %158 = dma.done [#allocation7], 128
    $region33: #{hetemb_forward.1} parent=1 // pred_fallthru
      _
    %159 = vsyncpa [#allocation3], 1
    %160 = vsyncpa [#allocation4], 1
    %161 = vsyncpa [#allocation7], 1

</llo_original>
